<compile_context>
chip_gen: v7x
topology: tpu7x:2x2x1
jax: 0.10.0
libtpu: 0.0.40
codegen_flags: <defaults>
</compile_context>

<pallas_src>
import functools
import math

import jax
import jax.numpy as jnp
from jax.experimental import pallas as pl
from jax.experimental.pallas import tpu as pltpu


DEFAULT_MASK_VALUE = -0.7 * float(jnp.finfo(jnp.float32).max)
_LANE = 128


def _sdpa_kernel(*refs, scale, compute_dtype, has_mask, approx_recip):
    if has_mask:
        q_ref, k_ref, v_ref, mask_ref, o_ref, m_sc, l_sc, acc_sc = refs
    else:
        q_ref, k_ref, v_ref, o_ref, m_sc, l_sc, acc_sc = refs
        mask_ref = None

    ki = pl.program_id(2)

    @pl.when(ki == 0)
    def _():
        m_sc[...] = jnp.full_like(m_sc, -jnp.inf)
        l_sc[...] = jnp.zeros_like(l_sc)
        acc_sc[...] = jnp.zeros_like(acc_sc)

    # Fold 1/sqrt(dk) into q (tq x dk multiply, cheaper than scaling the
    # (tq, tk) score matrix every inner step), then downcast MXU inputs.
    q = (q_ref[...] * scale).astype(compute_dtype)   # (G, tq, dk)
    k = k_ref[...].astype(compute_dtype)              # (G, tk, dk)
    v = v_ref[...].astype(compute_dtype)              # (G, tk, dv)

    # scores = (q*scale) @ k^T, batched over the packed (batch, head) group.
    s = jax.lax.dot_general(
        q, k, (((2,), (2,)), ((0,), (0,))),
        preferred_element_type=jnp.float32)            # (G, tq, tk)

    if has_mask:
        s = jnp.where(mask_ref[...] != 0, DEFAULT_MASK_VALUE, s)

    # Online softmax with lane-dense running stats (all 128 lanes hold the
    # same per-row value -> no masked partial stores in the hot loop).
    m_prev = m_sc[...]                                  # (G, tq, 128)
    m_new = jnp.maximum(m_prev, s.max(axis=-1, keepdims=True))
    alpha = jnp.exp(m_prev - m_new)                     # (G, tq, 128)
    p = jnp.exp(s - m_new[..., :1])                     # (G, tq, tk)

    l_sc[...] = alpha * l_sc[...] + p.sum(axis=-1, keepdims=True)
    m_sc[...] = m_new

    pv = jax.lax.dot_general(
        p.astype(compute_dtype), v, (((2,), (1,)), ((0,), (0,))),
        preferred_element_type=jnp.float32)             # (G, tq, dv)

    dv = acc_sc.shape[-1]
    alpha_acc = alpha if dv == _LANE else alpha[..., :1]
    acc_sc[...] = alpha_acc * acc_sc[...] + pv

    @pl.when(ki == pl.num_programs(2) - 1)
    def _():
        inv_l = pl.reciprocal(l_sc[...], approx=approx_recip)
        inv_l = inv_l if dv == _LANE else inv_l[..., :1]
        o_ref[...] = (acc_sc[...] * inv_l).astype(o_ref.dtype)


def _pick_tile(n, candidates=(512, 256, 128)):
    for t in candidates:
        if n >= t and n % t == 0:
            return t
    return n  # full extent — always a legal block


def _pick_group(bh, tq, target_rows=256):
    """Pack multiple (batch, head) pairs per grid step when q tiles are small."""
    want = min(max(1, target_rows // max(tq, 1)), bh)
    g = 1
    for cand in range(want, 0, -1):
        if bh % cand == 0:
            g = cand
            break
    # Keep at least 2 steps on the leading 'parallel' axis (v7x: 2 TensorCores).
    if bh >= 2 and bh // g < 2:
        for cand in range(g, 0, -1):
            if bh % cand == 0 and bh // cand >= 2:
                g = cand
                break
    return g


def scaled_dot_product_attention(Q, K, V, attn_mask=None, *, compute_dtype=None):
    """Q:(B,H,Lq,Dk) K:(B,H,Lk,Dk) V:(B,H,Lk,Dv) attn_mask:(B,H,Lq,Lk) bool (True == mask out)."""
    B, H, Lq, Dk = Q.shape
    Lk = K.shape[2]
    Dv = V.shape[3]
    BH = B * H

    if compute_dtype is None:
        # bf16 MXU inputs (with f32 accumulation) when inputs are already low
        # precision; exact f32 otherwise. Pass compute_dtype=jnp.bfloat16 for
        # the fast MXU path on f32 inputs (standard flash-attention precision).
        compute_dtype = (jnp.bfloat16 if jnp.dtype(Q.dtype).itemsize <= 2
                         else jnp.float32)
    cdt = jnp.dtype(compute_dtype)
    approx_recip = cdt == jnp.dtype(jnp.bfloat16)

    q = Q.reshape(BH, Lq, Dk)
    k = K.reshape(BH, Lk, Dk)
    v = V.reshape(BH, Lk, Dv)

    tq = _pick_tile(Lq)
    tk = _pick_tile(Lk)
    G = _pick_group(BH, tq)
    scale = 1.0 / math.sqrt(Dk)
    has_mask = attn_mask is not None

    grid = (BH // G, Lq // tq, Lk // tk)

    in_specs = [
        pl.BlockSpec((G, tq, Dk), lambda b, i, j: (b, i, 0)),   # Q
        pl.BlockSpec((G, tk, Dk), lambda b, i, j: (b, j, 0)),   # K
        pl.BlockSpec((G, tk, Dv), lambda b, i, j: (b, j, 0)),   # V
    ]
    args = [q, k, v]
    if has_mask:
        # int8 mask (nonzero == masked out): 4x less HBM traffic than int32.
        mask = attn_mask.astype(jnp.int8).reshape(BH, Lq, Lk)
        in_specs.append(pl.BlockSpec((G, tq, tk), lambda b, i, j: (b, i, j)))
        args.append(mask)

    # VMEM budget: every BlockSpec input/output is double-buffered. Only set an
    # explicit limit when the working set approaches the v7x scoped default.
    in_bytes = jnp.dtype(Q.dtype).itemsize
    per_step = (G * tq * Dk + G * tk * Dk + G * tk * Dv + G * tq * Dv) * in_bytes
    if has_mask:
        per_step += G * tq * tk  # int8
    scratch_bytes = (2 * G * tq * _LANE + G * tq * Dv) * 4
    vmem_bytes = 2 * per_step + scratch_bytes
    vmem_limit = None
    if vmem_bytes > 24 * 1024 * 1024:
        vmem_limit = min(int(vmem_bytes * 1.5), 64 * 1024 * 1024)

    kernel = functools.partial(
        _sdpa_kernel, scale=scale, compute_dtype=cdt,
        has_mask=has_mask, approx_recip=approx_recip)

    out = pl.pallas_call(
        kernel,
        out_shape=jax.ShapeDtypeStruct((BH, Lq, Dv), Q.dtype),
        grid_spec=pltpu.PrefetchScalarGridSpec(
            num_scalar_prefetch=0,
            grid=grid,
            in_specs=in_specs,
            out_specs=pl.BlockSpec((G, tq, Dv), lambda b, i, j: (b, i, 0)),
            scratch_shapes=[
                pltpu.VMEM((G, tq, _LANE), jnp.float32),   # running max (lane-dense)
                pltpu.VMEM((G, tq, _LANE), jnp.float32),   # running denom (lane-dense)
                pltpu.VMEM((G, tq, Dv), jnp.float32),      # running context
            ],
        ),
        compiler_params=pltpu.CompilerParams(
            dimension_semantics=("parallel", "parallel", "arbitrary"),
            vmem_limit_bytes=vmem_limit),
    )(*args)

    return out.reshape(B, H, Lq, Dv)


if __name__ == "__main__":
    key = jax.random.PRNGKey(0)
    kq, kk, kv = jax.random.split(key, 3)

    batch, n_heads, len_q, len_k, d_k, d_v = 2, 4, 8, 8, 32, 32

    Q = jax.random.normal(kq, (batch, n_heads, len_q, d_k), dtype=jnp.float32)
    K = jax.random.normal(kk, (batch, n_heads, len_k, d_k), dtype=jnp.float32)
    V = jax.random.normal(kv, (batch, n_heads, len_k, d_v), dtype=jnp.float32)

    # Causal mask: True above the diagonal == masked out (torch masked_fill_
    # semantics). No query row is fully masked.
    causal = jnp.triu(jnp.ones((len_q, len_k), dtype=bool), k=1)
    attn_mask = jnp.broadcast_to(causal, (batch, n_heads, len_q, len_k))

    def ref_attn(q, k, v, mask):
        s = jnp.einsum("bhqd,bhkd->bhqk", q, k) / math.sqrt(d_k)
        if mask is not None:
            s = jnp.where(mask, -jnp.inf, s)
        return jnp.einsum("bhqk,bhkd->bhqd", jax.nn.softmax(s, axis=-1), v)

    # 1) Masked, exact f32 compute (default for f32 inputs).
    out = jax.block_until_ready(scaled_dot_product_attention(Q, K, V, attn_mask))
    assert out.shape == (batch, n_heads, len_q, d_v)
    assert jnp.allclose(out, ref_attn(Q, K, V, attn_mask), atol=2e-5, rtol=2e-5)

    # 2) No-mask fast path (no mask tensor, no mask DMA at all).
    out_nm = jax.block_until_ready(scaled_dot_product_attention(Q, K, V, None))
    assert jnp.allclose(out_nm, ref_attn(Q, K, V, None), atol=2e-5, rtol=2e-5)

    # 3) bf16 MXU inputs with f32 accumulation (fast path from the perf review).
    out_bf = jax.block_until_ready(
        scaled_dot_product_attention(Q, K, V, attn_mask,
                                     compute_dtype=jnp.bfloat16))
    assert jnp.allclose(out_bf, ref_attn(Q, K, V, attn_mask), atol=3e-2, rtol=3e-2)

    print("KERNEL_OK")
</pallas_src>

<mosaic_0001>
module attributes {stable_mosaic.version = 11 : i64} {
  func.func @_sdpa_kernel(%arg0: i32, %arg1: i32, %arg2: i32, %arg3: memref<4x8x32xf32, #tpu.memory_space<vmem>>, %arg4: memref<4x8x32xf32, #tpu.memory_space<vmem>>, %arg5: memref<4x8x32xf32, #tpu.memory_space<vmem>>, %arg6: memref<4x8x8xi8, #tpu.memory_space<vmem>>, %arg7: memref<4x8x32xf32, #tpu.memory_space<vmem>>, %arg8: memref<4x8x128xf32, #tpu.memory_space<vmem>>, %arg9: memref<4x8x128xf32, #tpu.memory_space<vmem>>, %arg10: memref<4x8x32xf32, #tpu.memory_space<vmem>>) attributes {dimension_semantics = [#tpu.dimension_semantics<parallel>, #tpu.dimension_semantics<parallel>, #tpu.dimension_semantics<arbitrary>], iteration_bounds = array<i64: 2, 1, 1>, scalar_prefetch = 0 : i64, scratch_operands = 3 : i64, tpu.core_type = #tpu.core_type<tc>, window_params = [{transform_indices = @transform_0, window_bounds = array<i64: 4, 8, 32>}, {transform_indices = @transform_1, window_bounds = array<i64: 4, 8, 32>}, {transform_indices = @transform_2, window_bounds = array<i64: 4, 8, 32>}, {transform_indices = @transform_3, window_bounds = array<i64: 4, 8, 8>}, {transform_indices = @transform_4, window_bounds = array<i64: 4, 8, 32>}]} {
    %c0_i32 = arith.constant 0 : i32
    %0 = arith.cmpi eq, %arg2, %c0_i32 : i32
    %1 = arith.extui %0 : i1 to i32
    %c0_i32_0 = arith.constant 0 : i32
    %2 = arith.cmpi ne, %1, %c0_i32_0 : i32
    scf.if %2 {
      %cst_37 = arith.constant 0xFF800000 : f32
      %43 = vector.broadcast %cst_37 : f32 to vector<4x8x128xf32>
      %c0_38 = arith.constant 0 : index
      %c0_39 = arith.constant 0 : index
      %c0_40 = arith.constant 0 : index
      %44 = vector.load %arg8[%c0_38, %c0_39, %c0_40] : memref<4x8x128xf32, #tpu.memory_space<vmem>>, vector<4x8x128xf32>
      tpu.vector_store %arg8[%c0_38, %c0_39, %c0_40], %43 {strides = array<i32>} : memref<4x8x128xf32, #tpu.memory_space<vmem>>, vector<4x8x128xf32>,
      %cst_41 = arith.constant 0.000000e+00 : f32
      %45 = vector.broadcast %cst_41 : f32 to vector<4x8x128xf32>
      %c0_42 = arith.constant 0 : index
      %c0_43 = arith.constant 0 : index
      %c0_44 = arith.constant 0 : index
      %46 = vector.load %arg9[%c0_42, %c0_43, %c0_44] : memref<4x8x128xf32, #tpu.memory_space<vmem>>, vector<4x8x128xf32>
      tpu.vector_store %arg9[%c0_42, %c0_43, %c0_44], %45 {strides = array<i32>} : memref<4x8x128xf32, #tpu.memory_space<vmem>>, vector<4x8x128xf32>,
      %cst_45 = arith.constant 0.000000e+00 : f32
      %47 = vector.broadcast %cst_45 : f32 to vector<4x8x32xf32>
      %c0_46 = arith.constant 0 : index
      %c0_47 = arith.constant 0 : index
      %c0_48 = arith.constant 0 : index
      %48 = vector.load %arg10[%c0_46, %c0_47, %c0_48] : memref<4x8x32xf32, #tpu.memory_space<vmem>>, vector<4x8x32xf32>
      tpu.vector_store %arg10[%c0_46, %c0_47, %c0_48], %47 {strides = array<i32>} : memref<4x8x32xf32, #tpu.memory_space<vmem>>, vector<4x8x32xf32>,
    } else {
    }
    %c0 = arith.constant 0 : index
    %c0_1 = arith.constant 0 : index
    %c0_2 = arith.constant 0 : index
    %3 = vector.load %arg3[%c0, %c0_1, %c0_2] : memref<4x8x32xf32, #tpu.memory_space<vmem>>, vector<4x8x32xf32>
    %cst = arith.constant 0.176776692 : f32
    %4 = vector.broadcast %cst : f32 to vector<4x8x32xf32>
    %5 = arith.mulf %3, %4 : vector<4x8x32xf32>
    %c0_3 = arith.constant 0 : index
    %c0_4 = arith.constant 0 : index
    %c0_5 = arith.constant 0 : index
    %6 = vector.load %arg4[%c0_3, %c0_4, %c0_5] : memref<4x8x32xf32, #tpu.memory_space<vmem>>, vector<4x8x32xf32>
    %c0_6 = arith.constant 0 : index
    %c0_7 = arith.constant 0 : index
    %c0_8 = arith.constant 0 : index
    %7 = vector.load %arg5[%c0_6, %c0_7, %c0_8] : memref<4x8x32xf32, #tpu.memory_space<vmem>>, vector<4x8x32xf32>
    %cst_9 = arith.constant dense<0.000000e+00> : vector<4x8x8xf32>
    %8 = tpu.matmul %5, %6, %cst_9 {dimension_numbers = #tpu.dot_dimension_numbers<[2], [2], [1], [1], [0, 0, 0, 1, 1, 1], [0], [0]>} : vector<4x8x32xf32>, vector<4x8x32xf32>, vector<4x8x8xf32> -> vector<4x8x8xf32>
    %c0_10 = arith.constant 0 : index
    %c0_11 = arith.constant 0 : index
    %c0_12 = arith.constant 0 : index
    %9 = vector.load %arg6[%c0_10, %c0_11, %c0_12] : memref<4x8x8xi8, #tpu.memory_space<vmem>>, vector<4x8x8xi8>
    %c0_i8 = arith.constant 0 : i8
    %10 = vector.broadcast %c0_i8 : i8 to vector<4x8x8xi8>
    %11 = arith.cmpi ne, %9, %10 : vector<4x8x8xi8>
    %cst_13 = arith.constant -2.38197633E+38 : f32
    %12 = vector.broadcast %cst_13 : f32 to vector<4x8x8xf32>
    %13 = arith.select %11, %12, %8 : vector<4x8x8xi1>, vector<4x8x8xf32>
    %c0_14 = arith.constant 0 : index
    %c0_15 = arith.constant 0 : index
    %c0_16 = arith.constant 0 : index
    %14 = vector.load %arg8[%c0_14, %c0_15, %c0_16] : memref<4x8x128xf32, #tpu.memory_space<vmem>>, vector<4x8x128xf32>
    %cst_17 = arith.constant dense<0xFF800000> : vector<4x8xf32>
    %15 = vector.multi_reduction <maximumf>, %13, %cst_17 [2] : vector<4x8x8xf32> to vector<4x8xf32>
    %16 = vector.shape_cast %15 : vector<4x8xf32> to vector<4x8x1xf32>
    %17 = vector.broadcast %16 : vector<4x8x1xf32> to vector<4x8x128xf32>
    %18 = arith.maximumf %14, %17 : vector<4x8x128xf32>
    %19 = arith.subf %14, %18 : vector<4x8x128xf32>
    %20 = math.exp %19 : vector<4x8x128xf32>
    %21 = vector.extract_strided_slice %18 {offsets = [0, 0, 0], sizes = [4, 8, 1], strides = [1, 1, 1]} : vector<4x8x128xf32> to vector<4x8x1xf32>
    %22 = vector.broadcast %21 : vector<4x8x1xf32> to vector<4x8x8xf32>
    %23 = arith.subf %13, %22 : vector<4x8x8xf32>
    %24 = math.exp %23 : vector<4x8x8xf32>
    %c0_18 = arith.constant 0 : index
    %c0_19 = arith.constant 0 : index
    %c0_20 = arith.constant 0 : index
    %25 = vector.load %arg9[%c0_18, %c0_19, %c0_20] : memref<4x8x128xf32, #tpu.memory_space<vmem>>, vector<4x8x128xf32>
    %26 = arith.mulf %20, %25 : vector<4x8x128xf32>
    %cst_21 = arith.constant dense<0.000000e+00> : vector<4x8xf32>
    %27 = vector.multi_reduction <add>, %24, %cst_21 [2] : vector<4x8x8xf32> to vector<4x8xf32>
    %28 = vector.shape_cast %27 : vector<4x8xf32> to vector<4x8x1xf32>
    %29 = vector.broadcast %28 : vector<4x8x1xf32> to vector<4x8x128xf32>
    %30 = arith.addf %26, %29 : vector<4x8x128xf32>
    %c0_22 = arith.constant 0 : index
    %c0_23 = arith.constant 0 : index
    %c0_24 = arith.constant 0 : index
    %31 = vector.load %arg9[%c0_22, %c0_23, %c0_24] : memref<4x8x128xf32, #tpu.memory_space<vmem>>, vector<4x8x128xf32>
    tpu.vector_store %arg9[%c0_22, %c0_23, %c0_24], %30 {strides = array<i32>} : memref<4x8x128xf32, #tpu.memory_space<vmem>>, vector<4x8x128xf32>,
    %c0_25 = arith.constant 0 : index
    %c0_26 = arith.constant 0 : index
    %c0_27 = arith.constant 0 : index
    %32 = vector.load %arg8[%c0_25, %c0_26, %c0_27] : memref<4x8x128xf32, #tpu.memory_space<vmem>>, vector<4x8x128xf32>
    tpu.vector_store %arg8[%c0_25, %c0_26, %c0_27], %18 {strides = array<i32>} : memref<4x8x128xf32, #tpu.memory_space<vmem>>, vector<4x8x128xf32>,
    %cst_28 = arith.constant dense<0.000000e+00> : vector<4x8x32xf32>
    %33 = tpu.matmul %24, %7, %cst_28 {dimension_numbers = #tpu.dot_dimension_numbers<[2], [1], [1], [2], [0, 0, 0, 1, 1, 2], [0], [0]>} : vector<4x8x8xf32>, vector<4x8x32xf32>, vector<4x8x32xf32> -> vector<4x8x32xf32>
    %34 = vector.extract_strided_slice %20 {offsets = [0, 0, 0], sizes = [4, 8, 1], strides = [1, 1, 1]} : vector<4x8x128xf32> to vector<4x8x1xf32>
    %c0_29 = arith.constant 0 : index
    %c0_30 = arith.constant 0 : index
    %c0_31 = arith.constant 0 : index
    %35 = vector.load %arg10[%c0_29, %c0_30, %c0_31] : memref<4x8x32xf32, #tpu.memory_space<vmem>>, vector<4x8x32xf32>
    %36 = vector.broadcast %34 : vector<4x8x1xf32> to vector<4x8x32xf32>
    %37 = arith.mulf %36, %35 : vector<4x8x32xf32>
    %38 = arith.addf %37, %33 : vector<4x8x32xf32>
    %c0_32 = arith.constant 0 : index
    %c0_33 = arith.constant 0 : index
    %c0_34 = arith.constant 0 : index
    %39 = vector.load %arg10[%c0_32, %c0_33, %c0_34] : memref<4x8x32xf32, #tpu.memory_space<vmem>>, vector<4x8x32xf32>
    tpu.vector_store %arg10[%c0_32, %c0_33, %c0_34], %38 {strides = array<i32>} : memref<4x8x32xf32, #tpu.memory_space<vmem>>, vector<4x8x32xf32>,
    %c0_i32_35 = arith.constant 0 : i32
    %40 = arith.cmpi eq, %arg2, %c0_i32_35 : i32
    %41 = arith.extui %40 : i1 to i32
    %c0_i32_36 = arith.constant 0 : i32
    %42 = arith.cmpi ne, %41, %c0_i32_36 : i32
    scf.if %42 {
      %c0_37 = arith.constant 0 : index
      %c0_38 = arith.constant 0 : index
      %c0_39 = arith.constant 0 : index
      %43 = vector.load %arg9[%c0_37, %c0_38, %c0_39] : memref<4x8x128xf32, #tpu.memory_space<vmem>>, vector<4x8x128xf32>
      %44 = tpu.reciprocal %43 : vector<4x8x128xf32> -> vector<4x8x128xf32>
      %45 = vector.extract_strided_slice %44 {offsets = [0, 0, 0], sizes = [4, 8, 1], strides = [1, 1, 1]} : vector<4x8x128xf32> to vector<4x8x1xf32>
      %c0_40 = arith.constant 0 : index
      %c0_41 = arith.constant 0 : index
      %c0_42 = arith.constant 0 : index
      %46 = vector.load %arg10[%c0_40, %c0_41, %c0_42] : memref<4x8x32xf32, #tpu.memory_space<vmem>>, vector<4x8x32xf32>
      %47 = vector.broadcast %45 : vector<4x8x1xf32> to vector<4x8x32xf32>
      %48 = arith.mulf %46, %47 : vector<4x8x32xf32>
      %c0_43 = arith.constant 0 : index
      %c0_44 = arith.constant 0 : index
      %c0_45 = arith.constant 0 : index
      %49 = vector.load %arg7[%c0_43, %c0_44, %c0_45] : memref<4x8x32xf32, #tpu.memory_space<vmem>>, vector<4x8x32xf32>
      tpu.vector_store %arg7[%c0_43, %c0_44, %c0_45], %48 {strides = array<i32>} : memref<4x8x32xf32, #tpu.memory_space<vmem>>, vector<4x8x32xf32>,
    } else {
    }
    return
  }
  func.func @transform_0(%arg0: i32, %arg1: i32, %arg2: i32) -> (i32, i32, i32) {
    %c0_i32 = arith.constant 0 : i32
    %c0_i32_0 = arith.constant 0 : i32
    return %arg0, %arg1, %c0_i32 : i32, i32, i32
  }
  func.func @transform_1(%arg0: i32, %arg1: i32, %arg2: i32) -> (i32, i32, i32) {
    %c0_i32 = arith.constant 0 : i32
    %c0_i32_0 = arith.constant 0 : i32
    return %arg0, %arg2, %c0_i32 : i32, i32, i32
  }
  func.func @transform_2(%arg0: i32, %arg1: i32, %arg2: i32) -> (i32, i32, i32) {
    %c0_i32 = arith.constant 0 : i32
    %c0_i32_0 = arith.constant 0 : i32
    return %arg0, %arg2, %c0_i32 : i32, i32, i32
  }
  func.func @transform_3(%arg0: i32, %arg1: i32, %arg2: i32) -> (i32, i32, i32) {
    %c0_i32 = arith.constant 0 : i32
    return %arg0, %arg1, %arg2 : i32, i32, i32
  }
  func.func @transform_4(%arg0: i32, %arg1: i32, %arg2: i32) -> (i32, i32, i32) {
    %c0_i32 = arith.constant 0 : i32
    %c0_i32_0 = arith.constant 0 : i32
    return %arg0, %arg1, %c0_i32 : i32, i32, i32
  }
}

</mosaic_0001>

<llo_original>
// kernel: tpu_custom_call.1
$region0: #{tpu_custom_call.1}
  #allocation0 [shape = 'u32[]', space=smem, size = 0x4, offset = 0x4, fixed_abs, tag = 'smem constant byte address 0x4 - core index']
  #allocation1 [shape = 'u32[144,128]{1,0:T(1,128)}', space=vmem, size = 0x12000, scoped, tag = 'internal scratch']
  #allocation2 [shape = 'f32[4,8,128]{2,1,0:T(8,128)}', space=vmem, size = 0x4000, scoped, tag = 'scratch operand']
  #allocation3 [shape = 'f32[4,8,128]{2,1,0:T(8,128)}', space=vmem, size = 0x4000, scoped, tag = 'scratch operand']
  #allocation4 [shape = 'f32[4,8,32]{2,1,0:T(8,128)}', space=vmem, size = 0x4000, scoped, tag = 'scratch operand']
  %s0 = inlined_call_operand.hbm [shape: f32[8,8,32], index: 0, kind: input, shape index: {}]
  %s1 = inlined_call_operand.hbm [shape: f32[8,8,32], index: 1, kind: input, shape index: {}]
  %s2 = inlined_call_operand.hbm [shape: f32[8,8,32], index: 2, kind: input, shape index: {}]
  %s3 = inlined_call_operand.hbm [shape: s8[8,8,8], index: 3, kind: input, shape index: {}]
  %s4 = inlined_call_operand.hbm [shape: f32[8,8,32], index: 4, kind: output, shape index: {}]
  %s5 = sld [smem:[#allocation0]]
  $region73: #{tpu_custom_call.1} parent=0
    _
  %s7 = ssub.s32 1, %s5
  %s8 = scalar_select 0, %s7, %s5
  $region1: #{tpu_custom_call.1} parent=0
    #allocation5 [shape = 'u8[32768]{0}', space=vmem, size = 0x8000, scoped, tag = 'input window, operand 0']
    #allocation6 [shape = 's32[2]{0}', space=sflag, size = 0x8, scoped, tag = 'scoped memory for tpu_custom_call.1']
    #allocation7 [shape = 's32[2]{0}', space=sflag, size = 0x8, scoped, tag = 'scoped memory for tpu_custom_call.1']
    #allocation8 [shape = 'u8[32768]{0}', space=vmem, size = 0x8000, scoped, tag = 'input window, operand 1']
    #allocation9 [shape = 's32[2]{0}', space=sflag, size = 0x8, scoped, tag = 'scoped memory for tpu_custom_call.1']
    #allocation10 [shape = 'u8[32768]{0}', space=vmem, size = 0x8000, scoped, tag = 'input window, operand 2']
    #allocation11 [shape = 'u8[8192]{0}', space=vmem, size = 0x2000, scoped, tag = 'input window, operand 3']
    #allocation12 [shape = 's32[2]{0}', space=sflag, size = 0x8, scoped, tag = 'scoped memory for tpu_custom_call.1']
    #allocation13 [shape = 'u8[32768]{0}', space=vmem, size = 0x8000, scoped, tag = 'output window, operand 0']
    %9 = vsyncpa [#allocation6], 0
    %s10 = scalar_lea.sflag [#allocation6], 1
    %11 = vsyncpa %s10, 0
    %12 = vsyncpa [#allocation9], 0
    %s13 = scalar_lea.sflag [#allocation9], 1
    %14 = vsyncpa %s13, 0
    %15 = vsyncpa [#allocation12], 0
    %s16 = scalar_lea.sflag [#allocation12], 1
    %17 = vsyncpa %s16, 0
    %18 = vsyncpa [#allocation7], 0
    %s19 = scalar_lea.sflag [#allocation7], 1
    %20 = vsyncpa %s19, 0
    loop: start=0, step=1, limit=4
    $region2: #{tpu_custom_call.1} parent=1 // loop_pre_header
      _
    $region3: #{tpu_custom_call.1} parent=1 // loop_header
      %s22 = sphi 0, %s26
      %p23 = scmp.ge.s32.totalorder %s22, 4
      %s29 = sphi 0, %s48
      %s30 = sphi 0, %s44
      %s31 = sphi 0, %s40
      %s32 = sphi 0, %s29
      %s33 = sphi 0, %s30
      %s34 = sphi 0, %s31
      %s35 = sphi 0, %s32
      %s36 = sphi 0, %s33
      %s37 = sphi 0, %s34
      %s53 = sphi 0, %s55
      %s56 = sphi 0, %s53
      %s57 = sphi 0, %s56
      %s73 = sphi 0, %s57
      %s81 = sphi 0, %s83
      %s84 = sphi 0, %s81
      %s85 = sphi 0, %s84
      %s101 = sphi 0, %s85
      %s109 = sphi 0, %s111
      %s112 = sphi 0, %s109
      %s113 = sphi 0, %s112
      %s129 = sphi 0, %s113
      %s139 = sphi 0, %s141
      %s142 = sphi 0, %s139
      %s143 = sphi 0, %s142
      %s159 = sphi 0, %s143
      %s167 = sphi 0, %s169
      %s170 = sphi 0, %s167
      %s171 = sphi 0, %s170
      %s187 = sphi 0, %s171
    $region4: #{tpu_custom_call.1} parent=1 // loop_header_branch
      %25 = sbr.rel (%p23) target = $region8
    $region5: #{tpu_custom_call.1} parent=1 // loop_body
      %s27 = ssub.s32 %s22, 1
      %s28 = ssub.s32 %s22, 2
      %s38 = sadd.s32 1, %s31
      %p39 = scmp.ge.s32.totalorder %s38, 1
      %s40 = scalar_select %p39, 0, %s38
      %s41 = sadd.s32 1, %s30
      %s42 = scalar_select %p39, %s41, %s30
      %p43 = scmp.ge.s32.totalorder %s42, 1
      %s44 = scalar_select %p43, 0, %s42
      %s45 = sadd.s32 1, %s29
      %s46 = scalar_select %p43, %s45, %s29
      %p47 = scmp.ge.s32.totalorder %s46, 2
      %s48 = scalar_select %p47, 0, %s46
      %s49 = ssub.s32 %s29, %s48
      %s50 = ssub.s32 %s30, %s44
      %s51 = sor.u32 %s49, %s50
      %p52 = scmp.eq.s32.totalorder %s51, 0
      %s54 = sadd.s32 %s53, 1
      %s55 = scalar_select %p52, %s53, %s54
      %p58 = pneg %p52
      %p59 = scmp.eq.s32.totalorder %s22, 1
      %p60 = por %p58, %p59
      %p61 = scmp.ne.s32.totalorder %s53, %s56
      %p62 = scmp.eq.s32.totalorder %s22, 0
      %p63 = por %p61, %p62
      %p64 = scmp.ne.s32.totalorder %s53, %s56
      %p65 = scmp.eq.s32.totalorder %s27, 1
      %p66 = por %p64, %p65
      %p67 = scmp.ne.s32.totalorder %s56, %s57
      %p68 = scmp.eq.s32.totalorder %s27, 0
      %p69 = por %p67, %p68
      %p70 = scmp.ne.s32.totalorder %s56, %s57
      %p71 = scmp.eq.s32.totalorder %s28, 1
      %p72 = por %p70, %p71
      %p74 = scmp.ne.s32.totalorder %s57, %s73
      %p75 = scmp.eq.s32.totalorder %s28, 0
      %p76 = por %p74, %p75
      %s77 = ssub.s32 %s29, %s48
      %s78 = ssub.s32 %s31, %s40
      %s79 = sor.u32 %s77, %s78
      %p80 = scmp.eq.s32.totalorder %s79, 0
      %s82 = sadd.s32 %s81, 1
      %s83 = scalar_select %p80, %s81, %s82
      %p86 = pneg %p80
      %p87 = scmp.eq.s32.totalorder %s22, 1
      %p88 = por %p86, %p87
      %p89 = scmp.ne.s32.totalorder %s81, %s84
      %p90 = scmp.eq.s32.totalorder %s22, 0
      %p91 = por %p89, %p90
      %p92 = scmp.ne.s32.totalorder %s81, %s84
      %p93 = scmp.eq.s32.totalorder %s27, 1
      %p94 = por %p92, %p93
      %p95 = scmp.ne.s32.totalorder %s84, %s85
      %p96 = scmp.eq.s32.totalorder %s27, 0
      %p97 = por %p95, %p96
      %p98 = scmp.ne.s32.totalorder %s84, %s85
      %p99 = scmp.eq.s32.totalorder %s28, 1
      %p100 = por %p98, %p99
      %p102 = scmp.ne.s32.totalorder %s85, %s101
      %p103 = scmp.eq.s32.totalorder %s28, 0
      %p104 = por %p102, %p103
      %s105 = ssub.s32 %s29, %s48
      %s106 = ssub.s32 %s31, %s40
      %s107 = sor.u32 %s105, %s106
      %p108 = scmp.eq.s32.totalorder %s107, 0
      %s110 = sadd.s32 %s109, 1
      %s111 = scalar_select %p108, %s109, %s110
      %p114 = pneg %p108
      %p115 = scmp.eq.s32.totalorder %s22, 1
      %p116 = por %p114, %p115
      %p117 = scmp.ne.s32.totalorder %s109, %s112
      %p118 = scmp.eq.s32.totalorder %s22, 0
      %p119 = por %p117, %p118
      %p120 = scmp.ne.s32.totalorder %s109, %s112
      %p121 = scmp.eq.s32.totalorder %s27, 1
      %p122 = por %p120, %p121
      %p123 = scmp.ne.s32.totalorder %s112, %s113
      %p124 = scmp.eq.s32.totalorder %s27, 0
      %p125 = por %p123, %p124
      %p126 = scmp.ne.s32.totalorder %s112, %s113
      %p127 = scmp.eq.s32.totalorder %s28, 1
      %p128 = por %p126, %p127
      %p130 = scmp.ne.s32.totalorder %s113, %s129
      %p131 = scmp.eq.s32.totalorder %s28, 0
      %p132 = por %p130, %p131
      %s133 = ssub.s32 %s29, %s48
      %s134 = ssub.s32 %s30, %s44
      %s135 = sor.u32 %s133, %s134
      %s136 = ssub.s32 %s31, %s40
      %s137 = sor.u32 %s135, %s136
      %p138 = scmp.eq.s32.totalorder %s137, 0
      %s140 = sadd.s32 %s139, 1
      %s141 = scalar_select %p138, %s139, %s140
      %p144 = pneg %p138
      %p145 = scmp.eq.s32.totalorder %s22, 1
      %p146 = por %p144, %p145
      %p147 = scmp.ne.s32.totalorder %s139, %s142
      %p148 = scmp.eq.s32.totalorder %s22, 0
      %p149 = por %p147, %p148
      %p150 = scmp.ne.s32.totalorder %s139, %s142
      %p151 = scmp.eq.s32.totalorder %s27, 1
      %p152 = por %p150, %p151
      %p153 = scmp.ne.s32.totalorder %s142, %s143
      %p154 = scmp.eq.s32.totalorder %s27, 0
      %p155 = por %p153, %p154
      %p156 = scmp.ne.s32.totalorder %s142, %s143
      %p157 = scmp.eq.s32.totalorder %s28, 1
      %p158 = por %p156, %p157
      %p160 = scmp.ne.s32.totalorder %s143, %s159
      %p161 = scmp.eq.s32.totalorder %s28, 0
      %p162 = por %p160, %p161
      %s163 = ssub.s32 %s29, %s48
      %s164 = ssub.s32 %s30, %s44
      %s165 = sor.u32 %s163, %s164
      %p166 = scmp.eq.s32.totalorder %s165, 0
      %s168 = sadd.s32 %s167, 1
      %s169 = scalar_select %p166, %s167, %s168
      %p172 = pneg %p166
      %p173 = scmp.eq.s32.totalorder %s22, 1
      %p174 = por %p172, %p173
      %p175 = scmp.ne.s32.totalorder %s167, %s170
      %p176 = scmp.eq.s32.totalorder %s22, 0
      %p177 = por %p175, %p176
      %p178 = scmp.ne.s32.totalorder %s167, %s170
      %p179 = scmp.eq.s32.totalorder %s27, 1
      %p180 = por %p178, %p179
      %p181 = scmp.ne.s32.totalorder %s170, %s171
      %p182 = scmp.eq.s32.totalorder %s27, 0
      %p183 = por %p181, %p182
      %p184 = scmp.ne.s32.totalorder %s170, %s171
      %p185 = scmp.eq.s32.totalorder %s28, 1
      %p186 = por %p184, %p185
      %p188 = scmp.ne.s32.totalorder %s171, %s187
      %p189 = scmp.eq.s32.totalorder %s28, 0
      %p190 = por %p188, %p189
      %p191 = scmp.le.s32.totalorder 1, %s22
      %p192 = scmp.lt.s32.totalorder %s22, 3
      %p193 = pnand %p191, %p192
      %p194 = pneg %p193
      // Predicated region
      $region9: #{tpu_custom_call.1} parent=5 // pred_check
        _
      $region10: #{tpu_custom_call.1} parent=5 // pred_check_branch
        %196 = sbr.rel (%p193) target = $region12
      $region11: #{tpu_custom_call.1} parent=5 // pred_region
        %s197 = ssub.s32 %s22, 1
      $region12: #{tpu_custom_call.1} parent=5 // pred_fallthru
        _
      %p198 = scmp.lt.s32.totalorder %s22, 2
      // Predicated region
      $region13: #{tpu_custom_call.1} parent=5 // pred_check
        %p199 = pneg %p198
      $region14: #{tpu_custom_call.1} parent=5 // pred_check_branch
        %201 = sbr.rel (%p199) target = $region16
      $region15: #{tpu_custom_call.1} parent=5 // pred_region
        // Predicated region
        $region17: #{tpu_custom_call.1} parent=15 // pred_check
          %p202 = pneg %p63
        $region18: #{tpu_custom_call.1} parent=15 // pred_check_branch
          %204 = sbr.rel (%p202) target = $region20
        $region19: #{tpu_custom_call.1} parent=15 // pred_region
          %s205 = sand.u32 %s53, 1
          %s206 = scalar_lea.sflag [#allocation6], %s205
          %s207 = sand.u32 %s53, 1
          %s208 = smul.addr %s207, 32
          %s209 = scalar_lea.vmem [#allocation5], %s208
          %s210 = smul.u32 4, %s29
          %s212 = ssub.s32 512, 512
          %213 = vsyncadd %s206, %s212
          %s214 = sadd.s32 %s30, %s210
          %s215 = smul.addr %s214, 128
          %s216 = scalar_lea.hbm %s0, %s215
          %s217 = sshll.u32 %s209, 4
          %s218 = int_to_ptr.vmem [resolvable:$true] %s217
          %223 = dma.hbm_to_vmem [thread:$0]  %s216, 512, %s218, %s206, 128, 128, 8
        $region20: #{tpu_custom_call.1} parent=15 // pred_fallthru
          _
        // Predicated region
        $region21: #{tpu_custom_call.1} parent=15 // pred_check
          %p224 = pneg %p91
        $region22: #{tpu_custom_call.1} parent=15 // pred_check_branch
          %226 = sbr.rel (%p224) target = $region24
        $region23: #{tpu_custom_call.1} parent=15 // pred_region
          %s227 = sand.u32 %s22, 1
          %s228 = scalar_lea.sflag [#allocation9], %s227
          %s229 = sand.u32 %s81, 1
          %s230 = smul.addr %s229, 32
          %s231 = scalar_lea.vmem [#allocation8], %s230
          %s232 = smul.u32 4, %s29
          %s234 = ssub.s32 512, 512
          %235 = vsyncadd %s228, %s234
          %s236 = sadd.s32 %s31, %s232
          %s237 = smul.addr %s236, 128
          %s238 = scalar_lea.hbm %s1, %s237
          %s239 = sshll.u32 %s231, 4
          %s240 = int_to_ptr.vmem [resolvable:$true] %s239
          %245 = dma.hbm_to_vmem [thread:$0]  %s238, 512, %s240, %s228, 128, 128, 8
        $region24: #{tpu_custom_call.1} parent=15 // pred_fallthru
          _
        // Predicated region
        $region25: #{tpu_custom_call.1} parent=15 // pred_check
          %p246 = pneg %p119
        $region26: #{tpu_custom_call.1} parent=15 // pred_check_branch
          %248 = sbr.rel (%p246) target = $region28
        $region27: #{tpu_custom_call.1} parent=15 // pred_region
          %s249 = sand.u32 %s22, 1
          %s250 = scalar_lea.sflag [#allocation9], %s249
          %s251 = sand.u32 %s109, 1
          %s252 = smul.addr %s251, 32
          %s253 = scalar_lea.vmem [#allocation10], %s252
          %s254 = smul.u32 4, %s29
          %s256 = ssub.s32 512, 512
          %257 = vsyncadd %s250, %s256
          %s258 = sadd.s32 %s31, %s254
          %s259 = smul.addr %s258, 128
          %s260 = scalar_lea.hbm %s2, %s259
          %s261 = sshll.u32 %s253, 4
          %s262 = int_to_ptr.vmem [resolvable:$true] %s261
          %267 = dma.hbm_to_vmem [thread:$0]  %s260, 512, %s262, %s250, 128, 128, 8
        $region28: #{tpu_custom_call.1} parent=15 // pred_fallthru
          _
        // Predicated region
        $region29: #{tpu_custom_call.1} parent=15 // pred_check
          %p268 = pneg %p149
        $region30: #{tpu_custom_call.1} parent=15 // pred_check_branch
          %270 = sbr.rel (%p268) target = $region32
        $region31: #{tpu_custom_call.1} parent=15 // pred_region
          %s271 = sand.u32 %s139, 1
          %s272 = scalar_lea.sflag [#allocation12], %s271
          %s273 = sand.u32 %s139, 1
          %s274 = smul.addr %s273, 8
          %s275 = scalar_lea.vmem [#allocation11], %s274
          %s276 = smul.u32 4, %s29
          %s278 = ssub.s32 128, 128
          %279 = vsyncadd %s272, %s278
          %s280 = sadd.s32 %s31, %s30
          %s281 = sadd.s32 %s280, %s276
          %s282 = smul.addr %s281, 32
          %s283 = scalar_lea.hbm %s3, %s282
          %s284 = sshll.u32 %s275, 4
          %s285 = int_to_ptr.vmem [resolvable:$true] %s284
          %290 = dma.hbm_to_vmem [thread:$0]  %s283, 128, %s285, %s272, 32, 32, 2
        $region32: #{tpu_custom_call.1} parent=15 // pred_fallthru
          _
      $region16: #{tpu_custom_call.1} parent=5 // pred_fallthru
        _
      %p291 = scmp.le.s32.totalorder 1, %s22
      %p292 = scmp.lt.s32.totalorder %s22, 3
      %p293 = pnand %p291, %p292
      %p294 = pneg %p293
      // Predicated region
      $region33: #{tpu_custom_call.1} parent=5 // pred_check
        _
      $region34: #{tpu_custom_call.1} parent=5 // pred_check_branch
        %296 = sbr.rel (%p293) target = $region36
      $region35: #{tpu_custom_call.1} parent=5 // pred_region
        %s297 = ssub.s32 %s22, 1
        %s298 = sand.u32 %s56, 1
        %s299 = scalar_lea.sflag [#allocation6], %s298
        %s300 = sand.u32 %s56, 1
        %s301 = smul.addr %s300, 32
        %s302 = scalar_lea.vmem [#allocation5], %s301
        // Predicated region
        $region37: #{tpu_custom_call.1} parent=35 // pred_check
          %p303 = pneg %p69
        $region38: #{tpu_custom_call.1} parent=35 // pred_check_branch
          %305 = sbr.rel (%p303) target = $region40
        $region39: #{tpu_custom_call.1} parent=35 // pred_region
          %306 = dma.done %s299, 512
        $region40: #{tpu_custom_call.1} parent=35 // pred_fallthru
          _
        %s307 = sand.u32 %s27, 1
        %s308 = scalar_lea.sflag [#allocation9], %s307
        %s309 = sand.u32 %s84, 1
        %s310 = smul.addr %s309, 32
        %s311 = scalar_lea.vmem [#allocation8], %s310
        // Predicated region
        $region41: #{tpu_custom_call.1} parent=35 // pred_check
          %p312 = pneg %p97
        $region42: #{tpu_custom_call.1} parent=35 // pred_check_branch
          %314 = sbr.rel (%p312) target = $region44
        $region43: #{tpu_custom_call.1} parent=35 // pred_region
          %315 = dma.done %s308, 512
        $region44: #{tpu_custom_call.1} parent=35 // pred_fallthru
          _
        %s316 = sand.u32 %s27, 1
        %s317 = scalar_lea.sflag [#allocation9], %s316
        %s318 = sand.u32 %s112, 1
        %s319 = smul.addr %s318, 32
        %s320 = scalar_lea.vmem [#allocation10], %s319
        // Predicated region
        $region45: #{tpu_custom_call.1} parent=35 // pred_check
          %p321 = pneg %p125
        $region46: #{tpu_custom_call.1} parent=35 // pred_check_branch
          %323 = sbr.rel (%p321) target = $region48
        $region47: #{tpu_custom_call.1} parent=35 // pred_region
          %324 = dma.done %s317, 512
        $region48: #{tpu_custom_call.1} parent=35 // pred_fallthru
          _
        %s325 = sand.u32 %s142, 1
        %s326 = scalar_lea.sflag [#allocation12], %s325
        %s327 = sand.u32 %s142, 1
        %s328 = smul.addr %s327, 8
        %s329 = scalar_lea.vmem [#allocation11], %s328
        // Predicated region
        $region49: #{tpu_custom_call.1} parent=35 // pred_check
          %p330 = pneg %p155
        $region50: #{tpu_custom_call.1} parent=35 // pred_check_branch
          %332 = sbr.rel (%p330) target = $region52
        $region51: #{tpu_custom_call.1} parent=35 // pred_region
          %333 = dma.done %s326, 128
        $region52: #{tpu_custom_call.1} parent=35 // pred_fallthru
          _
        %s334 = sand.u32 %s56, 1
        %s335 = scalar_lea.sflag [#allocation6], %s334
        %s336 = sand.u32 %s56, 1
        %s337 = smul.addr %s336, 32
        %s338 = scalar_lea.vmem [#allocation5], %s337
        %p339 = pneg %p69
        %p340 = pneg %p66
        %s341 = sand.u32 %s27, 1
        %s342 = scalar_lea.sflag [#allocation9], %s341
        %s343 = sand.u32 %s84, 1
        %s344 = smul.addr %s343, 32
        %s345 = scalar_lea.vmem [#allocation8], %s344
        %p346 = pneg %p97
        %p347 = pneg %p94
        %s348 = sand.u32 %s27, 1
        %s349 = scalar_lea.sflag [#allocation9], %s348
        %s350 = sand.u32 %s112, 1
        %s351 = smul.addr %s350, 32
        %s352 = scalar_lea.vmem [#allocation10], %s351
        %p353 = pneg %p125
        %p354 = pneg %p122
        %s355 = sand.u32 %s142, 1
        %s356 = scalar_lea.sflag [#allocation12], %s355
        %s357 = sand.u32 %s142, 1
        %s358 = smul.addr %s357, 8
        %s359 = scalar_lea.vmem [#allocation11], %s358
        %p360 = pneg %p155
        %p361 = pneg %p152
        %p362 = pneg %p183
        %p363 = pneg %p180
        %s364 = sand.u32 %s170, 1
        %s365 = scalar_lea.sflag [#allocation7], %s364
        %s366 = sand.u32 %s170, 1
        %s367 = smul.addr %s366, 32
        %s368 = scalar_lea.vmem [#allocation13], %s367
        %s369 = smul.u32 4, %s32
        %s370 = smul.u32 4, %s32
        %s371 = smul.u32 4, %s32
        %s372 = smul.u32 4, %s32
        %s373 = smul.u32 4, %s32
        %p376 = scmp.eq.s32.totalorder %s34, 0
        // Predicated region
        $region53: #{tpu_custom_call.1} parent=35 // pred_check
          %p377 = pneg %p376
        $region54: #{tpu_custom_call.1} parent=35 // pred_check_branch
          %379 = sbr.rel (%p377) target = $region56
        $region55: #{tpu_custom_call.1} parent=35 // pred_region
          %380 = vst [vmem:[#allocation2] sm:$0xff] -inf
          %381 = vst [vmem:[#allocation2 + $0x8] sm:$0xff] -inf
          %382 = vst [vmem:[#allocation2 + $0x10] sm:$0xff] -inf
          %383 = vst [vmem:[#allocation2 + $0x18] sm:$0xff] -inf
          %384 = vst [vmem:[#allocation3] sm:$0xff] 0.0
          %385 = vst [vmem:[#allocation3 + $0x8] sm:$0xff] 0.0
          %386 = vst [vmem:[#allocation3 + $0x10] sm:$0xff] 0.0
          %387 = vst [vmem:[#allocation3 + $0x18] sm:$0xff] 0.0
          %vm388 = vcmask 261120
          %389 = vst.msk [vmem:[#allocation4] sm:$0xff] %vm388, 0.0
          %390 = vst.msk [vmem:[#allocation4 + $0x8] sm:$0xff] %vm388, 0.0
          %391 = vst.msk [vmem:[#allocation4 + $0x10] sm:$0xff] %vm388, 0.0
          %392 = vst.msk [vmem:[#allocation4 + $0x18] sm:$0xff] %vm388, 0.0
        $region56: #{tpu_custom_call.1} parent=35 // pred_fallthru
          _
        %v393 = vld [vmem:[%s302] sm:$0xff]
        %v394 = vld [vmem:[%s302 + $0x8] sm:$0xff]
        %v395 = vld [vmem:[%s302 + $0x10] sm:$0xff]
        %v396 = vld [vmem:[%s302 + $0x18] sm:$0xff]
        %v397 = vmul.f32 %v393, 0.17677669
        %v398 = vmul.f32 %v394, 0.17677669
        %v399 = vmul.f32 %v395, 0.17677669
        %v400 = vmul.f32 %v396, 0.17677669
        %v401 = vld [vmem:[%s311] sm:$0xff]
        %v402 = vld [vmem:[%s311 + $0x8] sm:$0xff]
        %v403 = vld [vmem:[%s311 + $0x10] sm:$0xff]
        %v404 = vld [vmem:[%s311 + $0x18] sm:$0xff]
        %v405 = vld [vmem:[%s320] sm:$0xff]
        %v406 = vld [vmem:[%s320 + $0x8] sm:$0xff]
        %v407 = vld [vmem:[%s320 + $0x10] sm:$0xff]
        %v408 = vld [vmem:[%s320 + $0x18] sm:$0xff]
        %vm409 = vcmask 261120
        %v411 = vsel %vm409, %v397, 0
        %v414 = vsel %vm409, %v401, 0
        %416 = vmatprep.subr.mxu0 0.0
        %417 = vmatpush1.xpose.msra.mxu0 %v414
        %418 = vmatprep.subr.mxu0 0.0
        %419 = vmatpush1.xpose.msra.mxu0 0.0
        %420 = vmatprep.subr.mxu0 0.0
        %421 = vmatpush1.xpose.msra.mxu0 0.0
        %422 = vmatprep.subr.mxu0 0.0
        %423 = vmatpush1.xpose.msra.mxu0 0.0
        %424 = vmatprep.subr.mxu0 0.0
        %425 = vmatpush1.xpose.msra.mxu0 0.0
        %426 = vmatprep.subr.mxu0 0.0
        %427 = vmatpush1.xpose.msra.mxu0 0.0
        %428 = vmatprep.subr.mxu0 0.0
        %429 = vmatpush1.xpose.msra.mxu0 0.0
        %430 = vmatprep.subr.mxu0 0.0
        %431 = vmatpush1.xpose.msra.mxu0 0.0
        %432 = vmatprep.subr.mxu0 0.0
        %433 = vmatpush1.xpose.msra.mxu0 0.0
        %434 = vmatprep.subr.mxu0 0.0
        %435 = vmatpush1.xpose.msra.mxu0 0.0
        %436 = vmatprep.subr.mxu0 0.0
        %437 = vmatpush1.xpose.msra.mxu0 0.0
        %438 = vmatprep.subr.mxu0 0.0
        %439 = vmatpush1.xpose.msra.mxu0 0.0
        %440 = vmatprep.subr.mxu0 0.0
        %441 = vmatpush1.xpose.msra.mxu0 0.0
        %442 = vmatprep.subr.mxu0 0.0
        %443 = vmatpush1.xpose.msra.mxu0 0.0
        %444 = vmatprep.subr.mxu0 0.0
        %445 = vmatpush1.xpose.msra.mxu0 0.0
        %446 = vmatprep.subr.mxu0 0.0
        %447 = vmatpush1.xpose.msra.mxu0 0.0
        %448 = vmatprep.subr.mxu0 0.0
        %449 = vmatpush1.xpose.msra.mxu0 0.0
        %450 = vmatprep.subr.mxu0 0.0
        %451 = vmatpush1.xpose.msra.mxu0 0.0
        %452 = vmatprep.subr.mxu0 0.0
        %453 = vmatpush1.xpose.msra.mxu0 0.0
        %454 = vmatprep.subr.mxu0 0.0
        %455 = vmatpush1.xpose.msra.mxu0 0.0
        %456 = vmatprep.subr.mxu0 0.0
        %457 = vmatpush1.xpose.msra.mxu0 0.0
        %458 = vmatprep.subr.mxu0 0.0
        %459 = vmatpush1.xpose.msra.mxu0 0.0
        %460 = vmatprep.subr.mxu0 0.0
        %461 = vmatpush1.xpose.msra.mxu0 0.0
        %462 = vmatprep.subr.mxu0 0.0
        %463 = vmatpush1.xpose.msra.mxu0 0.0
        %464 = vmatprep.subr.mxu0 0.0
        %465 = vmatpush1.xpose.msra.mxu0 0.0
        %466 = vmatprep.subr.mxu0 0.0
        %467 = vmatpush1.xpose.msra.mxu0 0.0
        %468 = vmatprep.subr.mxu0 0.0
        %469 = vmatpush1.xpose.msra.mxu0 0.0
        %470 = vmatprep.subr.mxu0 0.0
        %471 = vmatpush1.xpose.msra.mxu0 0.0
        %472 = vmatprep.subr.mxu0 0.0
        %473 = vmatpush1.xpose.msra.mxu0 0.0
        %474 = vmatprep.subr.mxu0 0.0
        %475 = vmatpush1.xpose.msra.mxu0 0.0
        %476 = vmatprep.subr.mxu0 0.0
        %477 = vmatpush1.xpose.msra.mxu0 0.0
        %478 = vmatprep.subr.mxu0 0.0
        %479 = vmatpush1.xpose.msra.mxu0 0.0
        %480 = vmatprep.mubr.f32.mxu0 0.0
        %481 = vmatmul.mubr.f32.gmra.mrb[0].mxu0 %v411
        %v482 = vpop.f32.mrb[0].mxu0
        %v483 = vadd.f32 0.0, %v482
        %v484 = vpop.f32.mrb[0].mxu0
        %485 = vdwg.mxu0
        %v487 = vsel %vm409, %v398, 0
        %v490 = vsel %vm409, %v402, 0
        %492 = vmatprep.subr.mxu0 0.0
        %493 = vmatpush1.xpose.msra.mxu0 %v490
        %494 = vmatprep.subr.mxu0 0.0
        %495 = vmatpush1.xpose.msra.mxu0 0.0
        %496 = vmatprep.subr.mxu0 0.0
        %497 = vmatpush1.xpose.msra.mxu0 0.0
        %498 = vmatprep.subr.mxu0 0.0
        %499 = vmatpush1.xpose.msra.mxu0 0.0
        %500 = vmatprep.subr.mxu0 0.0
        %501 = vmatpush1.xpose.msra.mxu0 0.0
        %502 = vmatprep.subr.mxu0 0.0
        %503 = vmatpush1.xpose.msra.mxu0 0.0
        %504 = vmatprep.subr.mxu0 0.0
        %505 = vmatpush1.xpose.msra.mxu0 0.0
        %506 = vmatprep.subr.mxu0 0.0
        %507 = vmatpush1.xpose.msra.mxu0 0.0
        %508 = vmatprep.subr.mxu0 0.0
        %509 = vmatpush1.xpose.msra.mxu0 0.0
        %510 = vmatprep.subr.mxu0 0.0
        %511 = vmatpush1.xpose.msra.mxu0 0.0
        %512 = vmatprep.subr.mxu0 0.0
        %513 = vmatpush1.xpose.msra.mxu0 0.0
        %514 = vmatprep.subr.mxu0 0.0
        %515 = vmatpush1.xpose.msra.mxu0 0.0
        %516 = vmatprep.subr.mxu0 0.0
        %517 = vmatpush1.xpose.msra.mxu0 0.0
        %518 = vmatprep.subr.mxu0 0.0
        %519 = vmatpush1.xpose.msra.mxu0 0.0
        %520 = vmatprep.subr.mxu0 0.0
        %521 = vmatpush1.xpose.msra.mxu0 0.0
        %522 = vmatprep.subr.mxu0 0.0
        %523 = vmatpush1.xpose.msra.mxu0 0.0
        %524 = vmatprep.subr.mxu0 0.0
        %525 = vmatpush1.xpose.msra.mxu0 0.0
        %526 = vmatprep.subr.mxu0 0.0
        %527 = vmatpush1.xpose.msra.mxu0 0.0
        %528 = vmatprep.subr.mxu0 0.0
        %529 = vmatpush1.xpose.msra.mxu0 0.0
        %530 = vmatprep.subr.mxu0 0.0
        %531 = vmatpush1.xpose.msra.mxu0 0.0
        %532 = vmatprep.subr.mxu0 0.0
        %533 = vmatpush1.xpose.msra.mxu0 0.0
        %534 = vmatprep.subr.mxu0 0.0
        %535 = vmatpush1.xpose.msra.mxu0 0.0
        %536 = vmatprep.subr.mxu0 0.0
        %537 = vmatpush1.xpose.msra.mxu0 0.0
        %538 = vmatprep.subr.mxu0 0.0
        %539 = vmatpush1.xpose.msra.mxu0 0.0
        %540 = vmatprep.subr.mxu0 0.0
        %541 = vmatpush1.xpose.msra.mxu0 0.0
        %542 = vmatprep.subr.mxu0 0.0
        %543 = vmatpush1.xpose.msra.mxu0 0.0
        %544 = vmatprep.subr.mxu0 0.0
        %545 = vmatpush1.xpose.msra.mxu0 0.0
        %546 = vmatprep.subr.mxu0 0.0
        %547 = vmatpush1.xpose.msra.mxu0 0.0
        %548 = vmatprep.subr.mxu0 0.0
        %549 = vmatpush1.xpose.msra.mxu0 0.0
        %550 = vmatprep.subr.mxu0 0.0
        %551 = vmatpush1.xpose.msra.mxu0 0.0
        %552 = vmatprep.subr.mxu0 0.0
        %553 = vmatpush1.xpose.msra.mxu0 0.0
        %554 = vmatprep.subr.mxu0 0.0
        %555 = vmatpush1.xpose.msra.mxu0 0.0
        %556 = vmatprep.mubr.f32.mxu0 0.0
        %557 = vmatmul.mubr.f32.gmra.mrb[0].mxu0 %v487
        %v558 = vpop.f32.mrb[0].mxu0
        %v559 = vadd.f32 0.0, %v558
        %v560 = vpop.f32.mrb[0].mxu0
        %561 = vdwg.mxu0
        %v563 = vsel %vm409, %v399, 0
        %v566 = vsel %vm409, %v403, 0
        %568 = vmatprep.subr.mxu0 0.0
        %569 = vmatpush1.xpose.msra.mxu0 %v566
        %570 = vmatprep.subr.mxu0 0.0
        %571 = vmatpush1.xpose.msra.mxu0 0.0
        %572 = vmatprep.subr.mxu0 0.0
        %573 = vmatpush1.xpose.msra.mxu0 0.0
        %574 = vmatprep.subr.mxu0 0.0
        %575 = vmatpush1.xpose.msra.mxu0 0.0
        %576 = vmatprep.subr.mxu0 0.0
        %577 = vmatpush1.xpose.msra.mxu0 0.0
        %578 = vmatprep.subr.mxu0 0.0
        %579 = vmatpush1.xpose.msra.mxu0 0.0
        %580 = vmatprep.subr.mxu0 0.0
        %581 = vmatpush1.xpose.msra.mxu0 0.0
        %582 = vmatprep.subr.mxu0 0.0
        %583 = vmatpush1.xpose.msra.mxu0 0.0
        %584 = vmatprep.subr.mxu0 0.0
        %585 = vmatpush1.xpose.msra.mxu0 0.0
        %586 = vmatprep.subr.mxu0 0.0
        %587 = vmatpush1.xpose.msra.mxu0 0.0
        %588 = vmatprep.subr.mxu0 0.0
        %589 = vmatpush1.xpose.msra.mxu0 0.0
        %590 = vmatprep.subr.mxu0 0.0
        %591 = vmatpush1.xpose.msra.mxu0 0.0
        %592 = vmatprep.subr.mxu0 0.0
        %593 = vmatpush1.xpose.msra.mxu0 0.0
        %594 = vmatprep.subr.mxu0 0.0
        %595 = vmatpush1.xpose.msra.mxu0 0.0
        %596 = vmatprep.subr.mxu0 0.0
        %597 = vmatpush1.xpose.msra.mxu0 0.0
        %598 = vmatprep.subr.mxu0 0.0
        %599 = vmatpush1.xpose.msra.mxu0 0.0
        %600 = vmatprep.subr.mxu0 0.0
        %601 = vmatpush1.xpose.msra.mxu0 0.0
        %602 = vmatprep.subr.mxu0 0.0
        %603 = vmatpush1.xpose.msra.mxu0 0.0
        %604 = vmatprep.subr.mxu0 0.0
        %605 = vmatpush1.xpose.msra.mxu0 0.0
        %606 = vmatprep.subr.mxu0 0.0
        %607 = vmatpush1.xpose.msra.mxu0 0.0
        %608 = vmatprep.subr.mxu0 0.0
        %609 = vmatpush1.xpose.msra.mxu0 0.0
        %610 = vmatprep.subr.mxu0 0.0
        %611 = vmatpush1.xpose.msra.mxu0 0.0
        %612 = vmatprep.subr.mxu0 0.0
        %613 = vmatpush1.xpose.msra.mxu0 0.0
        %614 = vmatprep.subr.mxu0 0.0
        %615 = vmatpush1.xpose.msra.mxu0 0.0
        %616 = vmatprep.subr.mxu0 0.0
        %617 = vmatpush1.xpose.msra.mxu0 0.0
        %618 = vmatprep.subr.mxu0 0.0
        %619 = vmatpush1.xpose.msra.mxu0 0.0
        %620 = vmatprep.subr.mxu0 0.0
        %621 = vmatpush1.xpose.msra.mxu0 0.0
        %622 = vmatprep.subr.mxu0 0.0
        %623 = vmatpush1.xpose.msra.mxu0 0.0
        %624 = vmatprep.subr.mxu0 0.0
        %625 = vmatpush1.xpose.msra.mxu0 0.0
        %626 = vmatprep.subr.mxu0 0.0
        %627 = vmatpush1.xpose.msra.mxu0 0.0
        %628 = vmatprep.subr.mxu0 0.0
        %629 = vmatpush1.xpose.msra.mxu0 0.0
        %630 = vmatprep.subr.mxu0 0.0
        %631 = vmatpush1.xpose.msra.mxu0 0.0
        %632 = vmatprep.mubr.f32.mxu0 0.0
        %633 = vmatmul.mubr.f32.gmra.mrb[0].mxu0 %v563
        %v634 = vpop.f32.mrb[0].mxu0
        %v635 = vadd.f32 0.0, %v634
        %v636 = vpop.f32.mrb[0].mxu0
        %637 = vdwg.mxu0
        %v639 = vsel %vm409, %v400, 0
        %v642 = vsel %vm409, %v404, 0
        %644 = vmatprep.subr.mxu0 0.0
        %645 = vmatpush1.xpose.msra.mxu0 %v642
        %646 = vmatprep.subr.mxu0 0.0
        %647 = vmatpush1.xpose.msra.mxu0 0.0
        %648 = vmatprep.subr.mxu0 0.0
        %649 = vmatpush1.xpose.msra.mxu0 0.0
        %650 = vmatprep.subr.mxu0 0.0
        %651 = vmatpush1.xpose.msra.mxu0 0.0
        %652 = vmatprep.subr.mxu0 0.0
        %653 = vmatpush1.xpose.msra.mxu0 0.0
        %654 = vmatprep.subr.mxu0 0.0
        %655 = vmatpush1.xpose.msra.mxu0 0.0
        %656 = vmatprep.subr.mxu0 0.0
        %657 = vmatpush1.xpose.msra.mxu0 0.0
        %658 = vmatprep.subr.mxu0 0.0
        %659 = vmatpush1.xpose.msra.mxu0 0.0
        %660 = vmatprep.subr.mxu0 0.0
        %661 = vmatpush1.xpose.msra.mxu0 0.0
        %662 = vmatprep.subr.mxu0 0.0
        %663 = vmatpush1.xpose.msra.mxu0 0.0
        %664 = vmatprep.subr.mxu0 0.0
        %665 = vmatpush1.xpose.msra.mxu0 0.0
        %666 = vmatprep.subr.mxu0 0.0
        %667 = vmatpush1.xpose.msra.mxu0 0.0
        %668 = vmatprep.subr.mxu0 0.0
        %669 = vmatpush1.xpose.msra.mxu0 0.0
        %670 = vmatprep.subr.mxu0 0.0
        %671 = vmatpush1.xpose.msra.mxu0 0.0
        %672 = vmatprep.subr.mxu0 0.0
        %673 = vmatpush1.xpose.msra.mxu0 0.0
        %674 = vmatprep.subr.mxu0 0.0
        %675 = vmatpush1.xpose.msra.mxu0 0.0
        %676 = vmatprep.subr.mxu0 0.0
        %677 = vmatpush1.xpose.msra.mxu0 0.0
        %678 = vmatprep.subr.mxu0 0.0
        %679 = vmatpush1.xpose.msra.mxu0 0.0
        %680 = vmatprep.subr.mxu0 0.0
        %681 = vmatpush1.xpose.msra.mxu0 0.0
        %682 = vmatprep.subr.mxu0 0.0
        %683 = vmatpush1.xpose.msra.mxu0 0.0
        %684 = vmatprep.subr.mxu0 0.0
        %685 = vmatpush1.xpose.msra.mxu0 0.0
        %686 = vmatprep.subr.mxu0 0.0
        %687 = vmatpush1.xpose.msra.mxu0 0.0
        %688 = vmatprep.subr.mxu0 0.0
        %689 = vmatpush1.xpose.msra.mxu0 0.0
        %690 = vmatprep.subr.mxu0 0.0
        %691 = vmatpush1.xpose.msra.mxu0 0.0
        %692 = vmatprep.subr.mxu0 0.0
        %693 = vmatpush1.xpose.msra.mxu0 0.0
        %694 = vmatprep.subr.mxu0 0.0
        %695 = vmatpush1.xpose.msra.mxu0 0.0
        %696 = vmatprep.subr.mxu0 0.0
        %697 = vmatpush1.xpose.msra.mxu0 0.0
        %698 = vmatprep.subr.mxu0 0.0
        %699 = vmatpush1.xpose.msra.mxu0 0.0
        %700 = vmatprep.subr.mxu0 0.0
        %701 = vmatpush1.xpose.msra.mxu0 0.0
        %702 = vmatprep.subr.mxu0 0.0
        %703 = vmatpush1.xpose.msra.mxu0 0.0
        %704 = vmatprep.subr.mxu0 0.0
        %705 = vmatpush1.xpose.msra.mxu0 0.0
        %706 = vmatprep.subr.mxu0 0.0
        %707 = vmatpush1.xpose.msra.mxu0 0.0
        %708 = vmatprep.mubr.f32.mxu0 0.0
        %709 = vmatmul.mubr.f32.gmra.mrb[0].mxu0 %v639
        %v710 = vpop.f32.mrb[0].mxu0
        %v711 = vadd.f32 0.0, %v710
        %v712 = vpop.f32.mrb[0].mxu0
        %713 = vdwg.mxu0
        %v714 = vld [vmem:[%s329] sm:$0x3]
        %v715 = vld [vmem:[%s329 + $0x2] sm:$0x3]
        %v716 = vld [vmem:[%s329 + $0x4] sm:$0x3]
        %v717 = vld [vmem:[%s329 + $0x6] sm:$0x3]
        %vm718 = vnez %v714
        %vm719 = vnez %v715
        %vm720 = vnez %v716
        %vm721 = vnez %v717
        %v722 = vsel %vm718, 16843009, 0
        %v723 = vsel %vm719, 16843009, 0
        %v724 = vsel %vm720, 16843009, 0
        %v725 = vsel %vm721, 16843009, 0
        %v726 = vunpack.c.0.s8 %v722
        %v727 = vunpack.c.0.s8 %v723
        %v728 = vunpack.c.0.s8 %v724
        %v729 = vunpack.c.0.s8 %v725
        %vm730 = vcmp.ne.s32.totalorder %v726, 0
        %vm731 = vcmp.ne.s32.totalorder %v727, 0
        %vm732 = vcmp.ne.s32.totalorder %v728, 0
        %vm733 = vcmp.ne.s32.totalorder %v729, 0
        %v734 = vsel %vm730, -2.3819763e+38, %v483
        %v735 = vsel %vm731, -2.3819763e+38, %v559
        %v736 = vsel %vm732, -2.3819763e+38, %v635
        %v737 = vsel %vm733, -2.3819763e+38, %v711
        %v738 = vld [vmem:[#allocation2] sm:$0xff]
        %v739 = vld [vmem:[#allocation2 + $0x8] sm:$0xff]
        %v740 = vld [vmem:[#allocation2 + $0x10] sm:$0xff]
        %v741 = vld [vmem:[#allocation2 + $0x18] sm:$0xff]
        %vm742 = vcmask 64512
        %v743 = vsel %vm742, %v734, -inf
        %744 = vmax.xlane.f32.xlu0 %v743
        %v745 = vpop.xlane.xlu0 %744
        %v746 = vsel %vm742, %v735, -inf
        %747 = vmax.xlane.f32.xlu0 %v746
        %v748 = vpop.xlane.xlu0 %747
        %v749 = vsel %vm742, %v736, -inf
        %750 = vmax.xlane.f32.xlu0 %v749
        %v751 = vpop.xlane.xlu0 %750
        %v752 = vsel %vm742, %v737, -inf
        %753 = vmax.xlane.f32.xlu0 %v752
        %v754 = vpop.xlane.xlu0 %753
        %v755 = vmax.f32 %v738, %v745
        %v756 = vmax.f32 %v739, %v748
        %v757 = vmax.f32 %v740, %v751
        %v758 = vmax.f32 %v741, %v754
        %v759 = vsub.f32 %v738, %v755
        %v760 = vsub.f32 %v739, %v756
        %v761 = vsub.f32 %v740, %v757
        %v762 = vsub.f32 %v741, %v758
        %v763 = vmul.f32 %v759, 1.442695
        %v764 = vpow.pop %v763
        %v765 = vmul.f32 %v760, 1.442695
        %v766 = vpow.pop %v765
        %v767 = vmul.f32 %v761, 1.442695
        %v768 = vpow.pop %v767
        %v769 = vmul.f32 %v762, 1.442695
        %v770 = vpow.pop %v769
        %772 = vset.pattern.permute.xlu0 0
        %773 = vperm.xlu0 %772, %v755
        %v774 = vpop.permute.xlu0 %773
        %777 = vset.pattern.permute.xlu0 0
        %778 = vperm.xlu0 %777, %v756
        %v779 = vpop.permute.xlu0 %778
        %782 = vset.pattern.permute.xlu0 0
        %783 = vperm.xlu0 %782, %v757
        %v784 = vpop.permute.xlu0 %783
        %787 = vset.pattern.permute.xlu0 0
        %788 = vperm.xlu0 %787, %v758
        %v789 = vpop.permute.xlu0 %788
        %v791 = vsub.f32 %v734, %v774
        %v792 = vsub.f32 %v735, %v779
        %v793 = vsub.f32 %v736, %v784
        %v794 = vsub.f32 %v737, %v789
        %v795 = vmul.f32 %v791, 1.442695
        %v796 = vpow.pop %v795
        %v797 = vmul.f32 %v792, 1.442695
        %v798 = vpow.pop %v797
        %v799 = vmul.f32 %v793, 1.442695
        %v800 = vpow.pop %v799
        %v801 = vmul.f32 %v794, 1.442695
        %v802 = vpow.pop %v801
        %v803 = vld [vmem:[#allocation3] sm:$0xff]
        %v804 = vld [vmem:[#allocation3 + $0x8] sm:$0xff]
        %v805 = vld [vmem:[#allocation3 + $0x10] sm:$0xff]
        %v806 = vld [vmem:[#allocation3 + $0x18] sm:$0xff]
        %v807 = vmul.f32 %v764, %v803
        %v808 = vmul.f32 %v766, %v804
        %v809 = vmul.f32 %v768, %v805
        %v810 = vmul.f32 %v770, %v806
        %v811 = vsel %vm742, %v796, 0.0
        %812 = vadd.xlane.f32.xlu0 %v811
        %v813 = vpop.xlane.xlu0 %812
        %v814 = vsel %vm742, %v798, 0.0
        %815 = vadd.xlane.f32.xlu0 %v814
        %v816 = vpop.xlane.xlu0 %815
        %v817 = vsel %vm742, %v800, 0.0
        %818 = vadd.xlane.f32.xlu0 %v817
        %v819 = vpop.xlane.xlu0 %818
        %v820 = vsel %vm742, %v802, 0.0
        %821 = vadd.xlane.f32.xlu0 %v820
        %v822 = vpop.xlane.xlu0 %821
        %v823 = vadd.f32 %v807, %v813
        %v824 = vadd.f32 %v808, %v816
        %v825 = vadd.f32 %v809, %v819
        %v826 = vadd.f32 %v810, %v822
        %827 = vst [vmem:[#allocation3] sm:$0xff] %v823
        %828 = vst [vmem:[#allocation3 + $0x8] sm:$0xff] %v824
        %829 = vst [vmem:[#allocation3 + $0x10] sm:$0xff] %v825
        %830 = vst [vmem:[#allocation3 + $0x18] sm:$0xff] %v826
        %831 = vst [vmem:[#allocation2] sm:$0xff] %v755
        %832 = vst [vmem:[#allocation2 + $0x8] sm:$0xff] %v756
        %833 = vst [vmem:[#allocation2 + $0x10] sm:$0xff] %v757
        %834 = vst [vmem:[#allocation2 + $0x18] sm:$0xff] %v758
        %v836 = vsel %vm742, %v796, 0
        %838 = vmatprep.subr.mxu0 0.0
        %839 = vmatpush1.msra.mxu0 %v405
        %840 = vmatprep.subr.mxu0 0.0
        %841 = vmatpush1.msra.mxu0 0.0
        %842 = vmatprep.subr.mxu0 0.0
        %843 = vmatpush1.msra.mxu0 0.0
        %844 = vmatprep.subr.mxu0 0.0
        %845 = vmatpush1.msra.mxu0 0.0
        %846 = vmatprep.subr.mxu0 0.0
        %847 = vmatpush1.msra.mxu0 0.0
        %848 = vmatprep.subr.mxu0 0.0
        %849 = vmatpush1.msra.mxu0 0.0
        %850 = vmatprep.subr.mxu0 0.0
        %851 = vmatpush1.msra.mxu0 0.0
        %852 = vmatprep.subr.mxu0 0.0
        %853 = vmatpush1.msra.mxu0 0.0
        %854 = vmatprep.subr.mxu0 0.0
        %855 = vmatpush1.msra.mxu0 0.0
        %856 = vmatprep.subr.mxu0 0.0
        %857 = vmatpush1.msra.mxu0 0.0
        %858 = vmatprep.subr.mxu0 0.0
        %859 = vmatpush1.msra.mxu0 0.0
        %860 = vmatprep.subr.mxu0 0.0
        %861 = vmatpush1.msra.mxu0 0.0
        %862 = vmatprep.subr.mxu0 0.0
        %863 = vmatpush1.msra.mxu0 0.0
        %864 = vmatprep.subr.mxu0 0.0
        %865 = vmatpush1.msra.mxu0 0.0
        %866 = vmatprep.subr.mxu0 0.0
        %867 = vmatpush1.msra.mxu0 0.0
        %868 = vmatprep.subr.mxu0 0.0
        %869 = vmatpush1.msra.mxu0 0.0
        %870 = vmatprep.subr.mxu0 0.0
        %871 = vmatpush1.msra.mxu0 0.0
        %872 = vmatprep.subr.mxu0 0.0
        %873 = vmatpush1.msra.mxu0 0.0
        %874 = vmatprep.subr.mxu0 0.0
        %875 = vmatpush1.msra.mxu0 0.0
        %876 = vmatprep.subr.mxu0 0.0
        %877 = vmatpush1.msra.mxu0 0.0
        %878 = vmatprep.subr.mxu0 0.0
        %879 = vmatpush1.msra.mxu0 0.0
        %880 = vmatprep.subr.mxu0 0.0
        %881 = vmatpush1.msra.mxu0 0.0
        %882 = vmatprep.subr.mxu0 0.0
        %883 = vmatpush1.msra.mxu0 0.0
        %884 = vmatprep.subr.mxu0 0.0
        %885 = vmatpush1.msra.mxu0 0.0
        %886 = vmatprep.subr.mxu0 0.0
        %887 = vmatpush1.msra.mxu0 0.0
        %888 = vmatprep.subr.mxu0 0.0
        %889 = vmatpush1.msra.mxu0 0.0
        %890 = vmatprep.subr.mxu0 0.0
        %891 = vmatpush1.msra.mxu0 0.0
        %892 = vmatprep.subr.mxu0 0.0
        %893 = vmatpush1.msra.mxu0 0.0
        %894 = vmatprep.subr.mxu0 0.0
        %895 = vmatpush1.msra.mxu0 0.0
        %896 = vmatprep.subr.mxu0 0.0
        %897 = vmatpush1.msra.mxu0 0.0
        %898 = vmatprep.subr.mxu0 0.0
        %899 = vmatpush1.msra.mxu0 0.0
        %900 = vmatprep.subr.mxu0 0.0
        %901 = vmatpush1.msra.mxu0 0.0
        %902 = vmatprep.mubr.f32.mxu0 0.0
        %903 = vmatmul.mubr.f32.gmra.mrb[0].mxu0 %v836
        %v904 = vpop.f32.mrb[0].mxu0
        %v905 = vadd.f32 0.0, %v904
        %v906 = vpop.f32.mrb[0].mxu0
        %907 = vdwg.mxu0
        %v909 = vsel %vm742, %v798, 0
        %911 = vmatprep.subr.mxu0 0.0
        %912 = vmatpush1.msra.mxu0 %v406
        %913 = vmatprep.subr.mxu0 0.0
        %914 = vmatpush1.msra.mxu0 0.0
        %915 = vmatprep.subr.mxu0 0.0
        %916 = vmatpush1.msra.mxu0 0.0
        %917 = vmatprep.subr.mxu0 0.0
        %918 = vmatpush1.msra.mxu0 0.0
        %919 = vmatprep.subr.mxu0 0.0
        %920 = vmatpush1.msra.mxu0 0.0
        %921 = vmatprep.subr.mxu0 0.0
        %922 = vmatpush1.msra.mxu0 0.0
        %923 = vmatprep.subr.mxu0 0.0
        %924 = vmatpush1.msra.mxu0 0.0
        %925 = vmatprep.subr.mxu0 0.0
        %926 = vmatpush1.msra.mxu0 0.0
        %927 = vmatprep.subr.mxu0 0.0
        %928 = vmatpush1.msra.mxu0 0.0
        %929 = vmatprep.subr.mxu0 0.0
        %930 = vmatpush1.msra.mxu0 0.0
        %931 = vmatprep.subr.mxu0 0.0
        %932 = vmatpush1.msra.mxu0 0.0
        %933 = vmatprep.subr.mxu0 0.0
        %934 = vmatpush1.msra.mxu0 0.0
        %935 = vmatprep.subr.mxu0 0.0
        %936 = vmatpush1.msra.mxu0 0.0
        %937 = vmatprep.subr.mxu0 0.0
        %938 = vmatpush1.msra.mxu0 0.0
        %939 = vmatprep.subr.mxu0 0.0
        %940 = vmatpush1.msra.mxu0 0.0
        %941 = vmatprep.subr.mxu0 0.0
        %942 = vmatpush1.msra.mxu0 0.0
        %943 = vmatprep.subr.mxu0 0.0
        %944 = vmatpush1.msra.mxu0 0.0
        %945 = vmatprep.subr.mxu0 0.0
        %946 = vmatpush1.msra.mxu0 0.0
        %947 = vmatprep.subr.mxu0 0.0
        %948 = vmatpush1.msra.mxu0 0.0
        %949 = vmatprep.subr.mxu0 0.0
        %950 = vmatpush1.msra.mxu0 0.0
        %951 = vmatprep.subr.mxu0 0.0
        %952 = vmatpush1.msra.mxu0 0.0
        %953 = vmatprep.subr.mxu0 0.0
        %954 = vmatpush1.msra.mxu0 0.0
        %955 = vmatprep.subr.mxu0 0.0
        %956 = vmatpush1.msra.mxu0 0.0
        %957 = vmatprep.subr.mxu0 0.0
        %958 = vmatpush1.msra.mxu0 0.0
        %959 = vmatprep.subr.mxu0 0.0
        %960 = vmatpush1.msra.mxu0 0.0
        %961 = vmatprep.subr.mxu0 0.0
        %962 = vmatpush1.msra.mxu0 0.0
        %963 = vmatprep.subr.mxu0 0.0
        %964 = vmatpush1.msra.mxu0 0.0
        %965 = vmatprep.subr.mxu0 0.0
        %966 = vmatpush1.msra.mxu0 0.0
        %967 = vmatprep.subr.mxu0 0.0
        %968 = vmatpush1.msra.mxu0 0.0
        %969 = vmatprep.subr.mxu0 0.0
        %970 = vmatpush1.msra.mxu0 0.0
        %971 = vmatprep.subr.mxu0 0.0
        %972 = vmatpush1.msra.mxu0 0.0
        %973 = vmatprep.subr.mxu0 0.0
        %974 = vmatpush1.msra.mxu0 0.0
        %975 = vmatprep.mubr.f32.mxu0 0.0
        %976 = vmatmul.mubr.f32.gmra.mrb[0].mxu0 %v909
        %v977 = vpop.f32.mrb[0].mxu0
        %v978 = vadd.f32 0.0, %v977
        %v979 = vpop.f32.mrb[0].mxu0
        %980 = vdwg.mxu0
        %v982 = vsel %vm742, %v800, 0
        %984 = vmatprep.subr.mxu0 0.0
        %985 = vmatpush1.msra.mxu0 %v407
        %986 = vmatprep.subr.mxu0 0.0
        %987 = vmatpush1.msra.mxu0 0.0
        %988 = vmatprep.subr.mxu0 0.0
        %989 = vmatpush1.msra.mxu0 0.0
        %990 = vmatprep.subr.mxu0 0.0
        %991 = vmatpush1.msra.mxu0 0.0
        %992 = vmatprep.subr.mxu0 0.0
        %993 = vmatpush1.msra.mxu0 0.0
        %994 = vmatprep.subr.mxu0 0.0
        %995 = vmatpush1.msra.mxu0 0.0
        %996 = vmatprep.subr.mxu0 0.0
        %997 = vmatpush1.msra.mxu0 0.0
        %998 = vmatprep.subr.mxu0 0.0
        %999 = vmatpush1.msra.mxu0 0.0
        %1000 = vmatprep.subr.mxu0 0.0
        %1001 = vmatpush1.msra.mxu0 0.0
        %1002 = vmatprep.subr.mxu0 0.0
        %1003 = vmatpush1.msra.mxu0 0.0
        %1004 = vmatprep.subr.mxu0 0.0
        %1005 = vmatpush1.msra.mxu0 0.0
        %1006 = vmatprep.subr.mxu0 0.0
        %1007 = vmatpush1.msra.mxu0 0.0
        %1008 = vmatprep.subr.mxu0 0.0
        %1009 = vmatpush1.msra.mxu0 0.0
        %1010 = vmatprep.subr.mxu0 0.0
        %1011 = vmatpush1.msra.mxu0 0.0
        %1012 = vmatprep.subr.mxu0 0.0
        %1013 = vmatpush1.msra.mxu0 0.0
        %1014 = vmatprep.subr.mxu0 0.0
        %1015 = vmatpush1.msra.mxu0 0.0
        %1016 = vmatprep.subr.mxu0 0.0
        %1017 = vmatpush1.msra.mxu0 0.0
        %1018 = vmatprep.subr.mxu0 0.0
        %1019 = vmatpush1.msra.mxu0 0.0
        %1020 = vmatprep.subr.mxu0 0.0
        %1021 = vmatpush1.msra.mxu0 0.0
        %1022 = vmatprep.subr.mxu0 0.0
        %1023 = vmatpush1.msra.mxu0 0.0
        %1024 = vmatprep.subr.mxu0 0.0
        %1025 = vmatpush1.msra.mxu0 0.0
        %1026 = vmatprep.subr.mxu0 0.0
        %1027 = vmatpush1.msra.mxu0 0.0
        %1028 = vmatprep.subr.mxu0 0.0
        %1029 = vmatpush1.msra.mxu0 0.0
        %1030 = vmatprep.subr.mxu0 0.0
        %1031 = vmatpush1.msra.mxu0 0.0
        %1032 = vmatprep.subr.mxu0 0.0
        %1033 = vmatpush1.msra.mxu0 0.0
        %1034 = vmatprep.subr.mxu0 0.0
        %1035 = vmatpush1.msra.mxu0 0.0
        %1036 = vmatprep.subr.mxu0 0.0
        %1037 = vmatpush1.msra.mxu0 0.0
        %1038 = vmatprep.subr.mxu0 0.0
        %1039 = vmatpush1.msra.mxu0 0.0
        %1040 = vmatprep.subr.mxu0 0.0
        %1041 = vmatpush1.msra.mxu0 0.0
        %1042 = vmatprep.subr.mxu0 0.0
        %1043 = vmatpush1.msra.mxu0 0.0
        %1044 = vmatprep.subr.mxu0 0.0
        %1045 = vmatpush1.msra.mxu0 0.0
        %1046 = vmatprep.subr.mxu0 0.0
        %1047 = vmatpush1.msra.mxu0 0.0
        %1048 = vmatprep.mubr.f32.mxu0 0.0
        %1049 = vmatmul.mubr.f32.gmra.mrb[0].mxu0 %v982
        %v1050 = vpop.f32.mrb[0].mxu0
        %v1051 = vadd.f32 0.0, %v1050
        %v1052 = vpop.f32.mrb[0].mxu0
        %1053 = vdwg.mxu0
        %v1055 = vsel %vm742, %v802, 0
        %1057 = vmatprep.subr.mxu0 0.0
        %1058 = vmatpush1.msra.mxu0 %v408
        %1059 = vmatprep.subr.mxu0 0.0
        %1060 = vmatpush1.msra.mxu0 0.0
        %1061 = vmatprep.subr.mxu0 0.0
        %1062 = vmatpush1.msra.mxu0 0.0
        %1063 = vmatprep.subr.mxu0 0.0
        %1064 = vmatpush1.msra.mxu0 0.0
        %1065 = vmatprep.subr.mxu0 0.0
        %1066 = vmatpush1.msra.mxu0 0.0
        %1067 = vmatprep.subr.mxu0 0.0
        %1068 = vmatpush1.msra.mxu0 0.0
        %1069 = vmatprep.subr.mxu0 0.0
        %1070 = vmatpush1.msra.mxu0 0.0
        %1071 = vmatprep.subr.mxu0 0.0
        %1072 = vmatpush1.msra.mxu0 0.0
        %1073 = vmatprep.subr.mxu0 0.0
        %1074 = vmatpush1.msra.mxu0 0.0
        %1075 = vmatprep.subr.mxu0 0.0
        %1076 = vmatpush1.msra.mxu0 0.0
        %1077 = vmatprep.subr.mxu0 0.0
        %1078 = vmatpush1.msra.mxu0 0.0
        %1079 = vmatprep.subr.mxu0 0.0
        %1080 = vmatpush1.msra.mxu0 0.0
        %1081 = vmatprep.subr.mxu0 0.0
        %1082 = vmatpush1.msra.mxu0 0.0
        %1083 = vmatprep.subr.mxu0 0.0
        %1084 = vmatpush1.msra.mxu0 0.0
        %1085 = vmatprep.subr.mxu0 0.0
        %1086 = vmatpush1.msra.mxu0 0.0
        %1087 = vmatprep.subr.mxu0 0.0
        %1088 = vmatpush1.msra.mxu0 0.0
        %1089 = vmatprep.subr.mxu0 0.0
        %1090 = vmatpush1.msra.mxu0 0.0
        %1091 = vmatprep.subr.mxu0 0.0
        %1092 = vmatpush1.msra.mxu0 0.0
        %1093 = vmatprep.subr.mxu0 0.0
        %1094 = vmatpush1.msra.mxu0 0.0
        %1095 = vmatprep.subr.mxu0 0.0
        %1096 = vmatpush1.msra.mxu0 0.0
        %1097 = vmatprep.subr.mxu0 0.0
        %1098 = vmatpush1.msra.mxu0 0.0
        %1099 = vmatprep.subr.mxu0 0.0
        %1100 = vmatpush1.msra.mxu0 0.0
        %1101 = vmatprep.subr.mxu0 0.0
        %1102 = vmatpush1.msra.mxu0 0.0
        %1103 = vmatprep.subr.mxu0 0.0
        %1104 = vmatpush1.msra.mxu0 0.0
        %1105 = vmatprep.subr.mxu0 0.0
        %1106 = vmatpush1.msra.mxu0 0.0
        %1107 = vmatprep.subr.mxu0 0.0
        %1108 = vmatpush1.msra.mxu0 0.0
        %1109 = vmatprep.subr.mxu0 0.0
        %1110 = vmatpush1.msra.mxu0 0.0
        %1111 = vmatprep.subr.mxu0 0.0
        %1112 = vmatpush1.msra.mxu0 0.0
        %1113 = vmatprep.subr.mxu0 0.0
        %1114 = vmatpush1.msra.mxu0 0.0
        %1115 = vmatprep.subr.mxu0 0.0
        %1116 = vmatpush1.msra.mxu0 0.0
        %1117 = vmatprep.subr.mxu0 0.0
        %1118 = vmatpush1.msra.mxu0 0.0
        %1119 = vmatprep.subr.mxu0 0.0
        %1120 = vmatpush1.msra.mxu0 0.0
        %1121 = vmatprep.mubr.f32.mxu0 0.0
        %1122 = vmatmul.mubr.f32.gmra.mrb[0].mxu0 %v1055
        %v1123 = vpop.f32.mrb[0].mxu0
        %v1124 = vadd.f32 0.0, %v1123
        %v1125 = vpop.f32.mrb[0].mxu0
        %1126 = vdwg.mxu0
        %v1127 = vld [vmem:[#allocation4] sm:$0xff]
        %v1128 = vld [vmem:[#allocation4 + $0x8] sm:$0xff]
        %v1129 = vld [vmem:[#allocation4 + $0x10] sm:$0xff]
        %v1130 = vld [vmem:[#allocation4 + $0x18] sm:$0xff]
        %1132 = vset.pattern.permute.xlu0 0
        %1133 = vperm.xlu0 %1132, %v764
        %v1134 = vpop.permute.xlu0 %1133
        %1137 = vset.pattern.permute.xlu0 0
        %1138 = vperm.xlu0 %1137, %v766
        %v1139 = vpop.permute.xlu0 %1138
        %1142 = vset.pattern.permute.xlu0 0
        %1143 = vperm.xlu0 %1142, %v768
        %v1144 = vpop.permute.xlu0 %1143
        %1147 = vset.pattern.permute.xlu0 0
        %1148 = vperm.xlu0 %1147, %v770
        %v1149 = vpop.permute.xlu0 %1148
        %v1151 = vmul.f32 %v1134, %v1127
        %v1152 = vmul.f32 %v1139, %v1128
        %v1153 = vmul.f32 %v1144, %v1129
        %v1154 = vmul.f32 %v1149, %v1130
        %v1155 = vadd.f32 %v1151, %v905
        %v1156 = vadd.f32 %v1152, %v978
        %v1157 = vadd.f32 %v1153, %v1051
        %v1158 = vadd.f32 %v1154, %v1124
        %1159 = vst.msk [vmem:[#allocation4] sm:$0xff] %vm409, %v1155
        %1160 = vst.msk [vmem:[#allocation4 + $0x8] sm:$0xff] %vm409, %v1156
        %1161 = vst.msk [vmem:[#allocation4 + $0x10] sm:$0xff] %vm409, %v1157
        %1162 = vst.msk [vmem:[#allocation4 + $0x18] sm:$0xff] %vm409, %v1158
        // Predicated region
        $region57: #{tpu_custom_call.1} parent=35 // pred_check
          %p1163 = pneg %p376
        $region58: #{tpu_custom_call.1} parent=35 // pred_check_branch
          %1165 = sbr.rel (%p1163) target = $region60
        $region59: #{tpu_custom_call.1} parent=35 // pred_region
          %v1166 = vld [vmem:[#allocation3] sm:$0xff]
          %v1167 = vld [vmem:[#allocation3 + $0x8] sm:$0xff]
          %v1168 = vld [vmem:[#allocation3 + $0x10] sm:$0xff]
          %v1169 = vld [vmem:[#allocation3 + $0x18] sm:$0xff]
          %v1170 = vrcp.pop %v1166
          %v1171 = vrcp.pop %v1167
          %v1172 = vrcp.pop %v1168
          %v1173 = vrcp.pop %v1169
          %v1174 = vld [vmem:[#allocation4] sm:$0xff]
          %v1175 = vld [vmem:[#allocation4 + $0x8] sm:$0xff]
          %v1176 = vld [vmem:[#allocation4 + $0x10] sm:$0xff]
          %v1177 = vld [vmem:[#allocation4 + $0x18] sm:$0xff]
          %1179 = vset.pattern.permute.xlu0 0
          %1180 = vperm.xlu0 %1179, %v1170
          %v1181 = vpop.permute.xlu0 %1180
          %1184 = vset.pattern.permute.xlu0 0
          %1185 = vperm.xlu0 %1184, %v1171
          %v1186 = vpop.permute.xlu0 %1185
          %1189 = vset.pattern.permute.xlu0 0
          %1190 = vperm.xlu0 %1189, %v1172
          %v1191 = vpop.permute.xlu0 %1190
          %1194 = vset.pattern.permute.xlu0 0
          %1195 = vperm.xlu0 %1194, %v1173
          %v1196 = vpop.permute.xlu0 %1195
          %v1198 = vmul.f32 %v1174, %v1181
          %v1199 = vmul.f32 %v1175, %v1186
          %v1200 = vmul.f32 %v1176, %v1191
          %v1201 = vmul.f32 %v1177, %v1196
          %1202 = vst.msk [vmem:[%s368] sm:$0xff] %vm409, %v1198
          %1203 = vst.msk [vmem:[%s368 + $0x8] sm:$0xff] %vm409, %v1199
          %1204 = vst.msk [vmem:[%s368 + $0x10] sm:$0xff] %vm409, %v1200
          %1205 = vst.msk [vmem:[%s368 + $0x18] sm:$0xff] %vm409, %v1201
        $region60: #{tpu_custom_call.1} parent=35 // pred_fallthru
          _
        %s1206 = sand.u32 %s170, 1
        %s1207 = scalar_lea.sflag [#allocation7], %s1206
        %s1208 = sand.u32 %s170, 1
        %s1209 = smul.addr %s1208, 32
        %s1210 = scalar_lea.vmem [#allocation13], %s1209
        // Predicated region
        $region61: #{tpu_custom_call.1} parent=35 // pred_check
          %p1211 = pneg %p180
        $region62: #{tpu_custom_call.1} parent=35 // pred_check_branch
          %1213 = sbr.rel (%p1211) target = $region64
        $region63: #{tpu_custom_call.1} parent=35 // pred_region
          %s1214 = smul.u32 4, %s32
          %s1216 = ssub.s32 512, 512
          %1217 = vsyncadd %s1207, %s1216
          %s1218 = sadd.s32 %s33, %s1214
          %s1219 = smul.addr %s1218, 128
          %s1220 = scalar_lea.hbm %s4, %s1219
          %s1221 = sshll.u32 %s1210, 4
          %s1222 = int_to_ptr.vmem [resolvable:$true] %s1221
          %1227 = dma.vmem_to_hbm [thread:$0]  %s1222, 512, %s1220, %s1207, 128, 128, 8
        $region64: #{tpu_custom_call.1} parent=35 // pred_fallthru
          _
      $region36: #{tpu_custom_call.1} parent=5 // pred_fallthru
        _
      %p1228 = scmp.le.s32.totalorder 2, %s22
      // Predicated region
      $region65: #{tpu_custom_call.1} parent=5 // pred_check
        %p1229 = pneg %p1228
      $region66: #{tpu_custom_call.1} parent=5 // pred_check_branch
        %1231 = sbr.rel (%p1229) target = $region68
      $region67: #{tpu_custom_call.1} parent=5 // pred_region
        %s1232 = ssub.s32 %s22, 2
        // Predicated region
        $region69: #{tpu_custom_call.1} parent=67 // pred_check
          %p1233 = pneg %p186
        $region70: #{tpu_custom_call.1} parent=67 // pred_check_branch
          %1235 = sbr.rel (%p1233) target = $region72
        $region71: #{tpu_custom_call.1} parent=67 // pred_region
          %s1236 = sand.u32 %s171, 1
          %s1237 = scalar_lea.sflag [#allocation7], %s1236
          %s1238 = sand.u32 %s171, 1
          %s1239 = smul.addr %s1238, 32
          %s1240 = scalar_lea.vmem [#allocation13], %s1239
          %1241 = dma.done %s1237, 512
        $region72: #{tpu_custom_call.1} parent=67 // pred_fallthru
          _
      $region68: #{tpu_custom_call.1} parent=5 // pred_fallthru
        _
    $region6: #{tpu_custom_call.1} parent=1 // loop_footer
      %s26 = sadd.s32 1, %s22
    $region7: #{tpu_custom_call.1} parent=1 // loop_footer_branch
      %21 = sbr.rel target = $region3
    $region8: #{tpu_custom_call.1} parent=1 // loop_exit
      _
    %1242 = vsyncpa [#allocation6], 1
    %s1243 = scalar_lea.sflag [#allocation6], 1
    %1244 = vsyncpa %s1243, 1
    %1245 = vsyncpa [#allocation9], 1
    %s1246 = scalar_lea.sflag [#allocation9], 1
    %1247 = vsyncpa %s1246, 1
    %1248 = vsyncpa [#allocation12], 1
    %s1249 = scalar_lea.sflag [#allocation12], 1
    %1250 = vsyncpa %s1249, 1
    %1251 = vsyncpa [#allocation7], 1
    %s1252 = scalar_lea.sflag [#allocation7], 1
    %1253 = vsyncpa %s1252, 1

</llo_original>
